<compile_context>
chip_gen: v7x
topology: tpu7x:2x2x1
jax: 0.10.0
libtpu: 0.0.40
codegen_flags: <defaults>
</compile_context>

<pallas_src>
import jax
import jax.numpy as jnp
import numpy as np
from jax.experimental import pallas as pl
from jax.experimental.pallas import tpu as pltpu


def _vmem_capacity_bytes():
    """Per-core VMEM capacity; conservative (v7x-safe) fallback if unknown."""
    try:
        return int(pltpu.get_tpu_info().vmem_capacity_bytes)
    except Exception:
        return 64 * 1024 * 1024


def _choose_hw_tile(hw, k, c, itemsize, max_tile, vmem_budget_bytes):
    """Largest lane-tile (multiple of 128, <= max_tile) fitting the VMEM budget.

    Ragged last tile is allowed (grid uses cdiv), so no divisibility requirement.
    """
    if hw <= 128:
        return hw  # single full-extent block (last dim equals full array dim)
    weight_bytes = 2 * (k * c * c * itemsize) + 2 * c * 4
    upper = min(max_tile, (hw // 128) * 128)
    best = 128
    t = 128
    while t <= upper:
        # 2x double-buffered K inputs + staging scratch + 2x output
        # + ~3 f32 full-tile slabs for the dot result / bias-add staging.
        per_lane = c * (3 * k * itemsize + 2 * itemsize + 12)
        if per_lane * t + weight_bytes <= vmem_budget_bytes:
            best = t
        t += 128
    return best


def _make_momentum_kernel(k_distinct, c, hw_total, hw_tile):
    """fused tile = W_flat @ stage(concat_k feat_k tile) + bias; also per-tile channel sums."""
    lanes_even = (hw_total % hw_tile == 0)

    def kernel(w_ref, b_ref, *refs):
        # w_ref:   [C, K*C]        conv1x1 weights (batch-independent, resident)
        # b_ref:   [C, 1]          conv bias (f32, resident)
        # refs[:K] feature tiles   each [1, C, HW_T]
        # refs[K]  fused output    [1, C, HW_T]   (unscaled)
        # refs[K+1] channel sums   [1, 1, C, 1]   (f32, per tile)
        # refs[K+2] VMEM scratch   [K*C, HW_T]    staging buffer
        x_refs = refs[:k_distinct]
        o_ref = refs[k_distinct]
        s_ref = refs[k_distinct + 1]
        xcat = refs[k_distinct + 2]
        hw_t = o_ref.shape[2]

        # Stage the K feature tiles into one contiguous buffer so the 1x1 conv
        # is a single MXU matmul with contraction K*C (one result slab, no
        # K-way f32 accumulator read-modify-write).
        for k in range(k_distinct):                      # static unroll
            xcat[k * c:(k + 1) * c, :] = x_refs[k][0]

        acc = jnp.dot(w_ref[...], xcat[...],
                      preferred_element_type=jnp.float32)        # [C, hw_t] f32
        fused = acc + b_ref[...]                                  # bias in epilogue
        o_ref[0] = fused.astype(o_ref.dtype)

        # Per-tile channel sums feeding CAB global average pooling.
        if lanes_even:
            s_ref[0, 0] = jnp.sum(fused, axis=-1, keepdims=True)
        else:
            # Ragged last tile: mask garbage lanes out of the reduction.
            t_idx = pl.program_id(0)
            col = jax.lax.broadcasted_iota(jnp.int32, (1, hw_t), 1)
            valid = (t_idx * hw_tile + col) < hw_total
            s_ref[0, 0] = jnp.sum(jnp.where(valid, fused, 0.0),
                                  axis=-1, keepdims=True)

    return kernel


def _momentum_conv_unscaled(w_flat, b_col, x_list, hw_tile=None):
    """Streamed NCHW 1x1-conv (unscaled) + per-tile channel sums.

    w_flat: [C, K*C]  (compute dtype)
    b_col:  [C, 1]    (f32)
    x_list: K arrays, each [B, C, HW] (compute dtype)
    returns: fused [B, C, HW] (compute dtype), sums [B, T, C, 1] (f32)
    """
    C, KC = w_flat.shape
    K = KC // C
    B, _, HW = x_list[0].shape
    x_dtype = x_list[0].dtype
    itemsize = jnp.dtype(x_dtype).itemsize

    vmem_cap = _vmem_capacity_bytes()
    vmem_budget = int(vmem_cap * 0.65)          # ~83 MiB on 128 MiB, ~41 MiB on 64 MiB
    vmem_limit = int(vmem_cap * 0.75)           # explicit margin for Mosaic scratch
    max_tile = 4096 if vmem_cap >= 96 * 1024 * 1024 else 2048

    if hw_tile is None:
        hw_tile = _choose_hw_tile(HW, K, C, itemsize, max_tile, vmem_budget)
    num_tiles = pl.cdiv(HW, hw_tile)

    in_specs = [
        # Weights / bias: constant block index -> DMA'd once, resident all grid.
        pl.BlockSpec((C, K * C), lambda t, b: (0, 0)),
        pl.BlockSpec((C, 1), lambda t, b: (0, 0)),
    ]
    in_specs += [pl.BlockSpec((1, C, hw_tile), lambda t, b: (b, 0, t))
                 for _ in range(K)]
    out_specs = (
        pl.BlockSpec((1, C, hw_tile), lambda t, b: (b, 0, t)),
        pl.BlockSpec((1, 1, C, 1), lambda t, b: (b, t, 0, 0)),
    )
    out_shape = (
        jax.ShapeDtypeStruct((B, C, HW), x_dtype),
        jax.ShapeDtypeStruct((B, num_tiles, C, 1), jnp.float32),
    )

    return pl.pallas_call(
        _make_momentum_kernel(K, C, HW, hw_tile),
        out_shape=out_shape,
        grid_spec=pltpu.PrefetchScalarGridSpec(
            num_scalar_prefetch=0,
            grid=(num_tiles, B),            # tile axis first: megacore can split it when B=1
            in_specs=in_specs,
            out_specs=out_specs,
            scratch_shapes=[pltpu.VMEM((K * C, hw_tile), x_dtype)],
        ),
        compiler_params=pltpu.CompilerParams(
            dimension_semantics=("parallel", "parallel"),
            vmem_limit_bytes=vmem_limit,
        ),
    )(w_flat, b_col, *x_list)


class MomentumLayerPallas:
    """JAX/Pallas port of MomentumLayer (conv1x1 fusion + ChannelAttentionBlock)."""

    def __init__(self, feature_dim, n_history=11, reduction=16, key=None,
                 compute_dtype=None):
        # compute_dtype=jnp.bfloat16 is recommended on v5e/v6e (kernel is DMA-bound;
        # bf16 halves the streamed bytes, accumulation/CAB stay f32).
        self.feature_dim = feature_dim
        self.n_history = n_history
        self.compute_dtype = compute_dtype
        C = feature_dim
        Cin = feature_dim * (n_history + 1)
        Cr = max(1, feature_dim // reduction)
        if key is None:
            key = jax.random.PRNGKey(0)
        k1, k2, k3 = jax.random.split(key, 3)

        # conv1x1: torch weight [Cout, Cin, 1, 1], xavier_uniform; bias zeros.
        bound = float(np.sqrt(6.0 / (Cin + C)))
        self.conv_w = jax.random.uniform(k1, (C, Cin), jnp.float32, -bound, bound)
        self.conv_b = jnp.zeros((C,), jnp.float32)

        # CAB fc layers (no bias), torch-default-like uniform init.
        b1 = 1.0 / np.sqrt(C)
        b2 = 1.0 / np.sqrt(Cr)
        self.fc1_w = jax.random.uniform(k2, (Cr, C), jnp.float32, -b1, b1)   # [Cr, C]
        self.fc2_w = jax.random.uniform(k3, (C, Cr), jnp.float32, -b2, b2)   # [C, Cr]

    def forward(self, current_feat, history_feats):
        if history_feats is None:
            history_feats = []
        history_feats = list(history_feats)[-self.n_history:]
        if len(history_feats) == 0:
            # Matches the PyTorch module: first cascade passes features through.
            return current_feat, [current_feat]

        feats = [current_feat] + history_feats          # distinct features only
        k_total = self.n_history + 1
        k_d = len(feats)

        B, C, H, W = current_feat.shape
        HW = H * W
        x_dtype = self.compute_dtype or current_feat.dtype

        # Split conv1x1 weight into per-feature [C, C] blocks; fold the
        # "pad with current_feat" duplication into the current feature's block
        # so each distinct feature is streamed from HBM exactly once.
        w_blocks = jnp.transpose(self.conv_w.reshape(C, k_total, C), (1, 0, 2))  # [Kt,C,C]
        if k_d < k_total:
            w_cur = w_blocks[0] + jnp.sum(w_blocks[k_d:], axis=0)
            w_eff = jnp.concatenate([w_cur[None], w_blocks[1:k_d]], axis=0)      # [Kd,C,C]
        else:
            w_eff = w_blocks
        # Flatten to [C, Kd*C] matching the in-kernel channel staging order.
        w_flat = jnp.transpose(w_eff, (1, 0, 2)).reshape(C, k_d * C).astype(x_dtype)
        b_col = self.conv_b[:, None].astype(jnp.float32)                          # [C, 1]

        x_flat = [f.reshape(B, C, HW).astype(x_dtype) for f in feats]   # free NCHW reshapes

        # Single streamed pass: unscaled fused output + per-tile channel sums.
        fused_flat, part_sums = _momentum_conv_unscaled(w_flat, b_col, x_flat)

        # Channel attention from the fused output's global average pooling (f32).
        y = jnp.sum(part_sums[..., 0], axis=1) / float(HW)              # [B, C]
        h = jnp.maximum(y @ self.fc1_w.T, 0.0)                          # [B, Cr]
        s = jax.nn.sigmoid(h @ self.fc2_w.T)                            # [B, C]

        # Cheap elementwise scale (one read + one write of [B,C,HW]).
        out = (fused_flat.astype(jnp.float32) * s[:, :, None]).astype(x_dtype)
        out = out.reshape(B, C, H, W)

        new_history = ([current_feat] + history_feats)[:self.n_history]
        return out, new_history


def _reference_forward(layer, current_feat, history_feats):
    """Pure-JAX reference mirroring the PyTorch MomentumLayer semantics (NCHW, f32)."""
    history_feats = list(history_feats)[-layer.n_history:]
    all_feats = [current_feat] + history_feats
    while len(all_feats) < layer.n_history + 1:
        all_feats.append(current_feat)
    concat = jnp.concatenate([f.astype(jnp.float32) for f in all_feats], axis=1)
    fused = (jnp.einsum('oc,bchw->bohw', layer.conv_w, concat)
             + layer.conv_b[None, :, None, None])
    y = jnp.mean(fused, axis=(2, 3))                         # [B, C]
    h = jnp.maximum(y @ layer.fc1_w.T, 0.0)                  # [B, Cr]
    s = jax.nn.sigmoid(h @ layer.fc2_w.T)                    # [B, C]
    return fused * s[:, :, None, None]


if __name__ == "__main__":
    B, C, H, W = 2, 32, 16, 16
    n_history = 3

    key = jax.random.PRNGKey(0)
    k_cur, k_h0, k_h1, k_params = jax.random.split(key, 4)
    current = jax.random.normal(k_cur, (B, C, H, W), jnp.float32)
    history = [
        jax.random.normal(k_h0, (B, C, H, W), jnp.float32),
        jax.random.normal(k_h1, (B, C, H, W), jnp.float32),
    ]

    # --- f32 path (tight check against the PyTorch-style reference) ---
    layer = MomentumLayerPallas(feature_dim=C, n_history=n_history,
                                reduction=16, key=k_params)
    fwd = jax.jit(lambda cur, hist: layer.forward(cur, hist))
    out, new_history = fwd(current, history)
    out = jax.block_until_ready(out)

    ref = jax.block_until_ready(_reference_forward(layer, current, history))
    np.testing.assert_allclose(np.asarray(out), np.asarray(ref),
                               rtol=5e-5, atol=5e-5)
    assert len(new_history) == min(n_history, 1 + len(history))

    # --- bf16 operand path (halves streamed HBM bytes; f32 accumulation/CAB) ---
    layer_bf16 = MomentumLayerPallas(feature_dim=C, n_history=n_history,
                                     reduction=16, key=k_params,
                                     compute_dtype=jnp.bfloat16)
    cur_bf = current.astype(jnp.bfloat16)
    hist_bf = [h.astype(jnp.bfloat16) for h in history]
    out_bf, _ = jax.jit(lambda cur, hist: layer_bf16.forward(cur, hist))(cur_bf, hist_bf)
    out_bf = jax.block_until_ready(out_bf)
    ref_bf = jax.block_until_ready(_reference_forward(layer_bf16, cur_bf, hist_bf))
    np.testing.assert_allclose(np.asarray(out_bf, dtype=np.float32),
                               np.asarray(ref_bf, dtype=np.float32),
                               rtol=3e-2, atol=3e-2)

    print("KERNEL_OK")
</pallas_src>

<mosaic_0001>
module attributes {stable_mosaic.version = 11 : i64} {
  func.func @kernel(%arg0: i32, %arg1: i32, %arg2: memref<32x96xf32, #tpu.memory_space<vmem>>, %arg3: memref<32x1xf32, #tpu.memory_space<vmem>>, %arg4: memref<1x32x256xf32, #tpu.memory_space<vmem>>, %arg5: memref<1x32x256xf32, #tpu.memory_space<vmem>>, %arg6: memref<1x32x256xf32, #tpu.memory_space<vmem>>, %arg7: memref<1x32x256xf32, #tpu.memory_space<vmem>>, %arg8: memref<1x1x32x1xf32, #tpu.memory_space<vmem>>, %arg9: memref<96x256xf32, #tpu.memory_space<vmem>>) attributes {dimension_semantics = [#tpu.dimension_semantics<parallel>, #tpu.dimension_semantics<parallel>], iteration_bounds = array<i64: 1, 2>, scalar_prefetch = 0 : i64, scratch_operands = 1 : i64, tpu.core_type = #tpu.core_type<tc>, window_params = [{pipeline_mode = #tpu.pipeline_mode<synchronous>, transform_indices = @transform_0, window_bounds = array<i64: 32, 96>}, {pipeline_mode = #tpu.pipeline_mode<synchronous>, transform_indices = @transform_1, window_bounds = array<i64: 32, 1>}, {transform_indices = @transform_2, window_bounds = array<i64: 1, 32, 256>}, {transform_indices = @transform_3, window_bounds = array<i64: 1, 32, 256>}, {transform_indices = @transform_4, window_bounds = array<i64: 1, 32, 256>}, {transform_indices = @transform_5, window_bounds = array<i64: 1, 32, 256>}, {transform_indices = @transform_6, window_bounds = array<i64: 1, 1, 32, 1>}]} {
    %c0 = arith.constant 0 : index
    %c0_0 = arith.constant 0 : index
    %c0_1 = arith.constant 0 : index
    %0 = vector.load %arg4[%c0, %c0_0, %c0_1] : memref<1x32x256xf32, #tpu.memory_space<vmem>>, vector<1x32x256xf32>
    %1 = vector.shape_cast %0 : vector<1x32x256xf32> to vector<32x256xf32>
    %c0_2 = arith.constant 0 : index
    %c0_3 = arith.constant 0 : index
    %2 = vector.load %arg9[%c0_2, %c0_3] : memref<96x256xf32, #tpu.memory_space<vmem>>, vector<32x256xf32>
    tpu.vector_store %arg9[%c0_2, %c0_3], %1 {strides = array<i32>} : memref<96x256xf32, #tpu.memory_space<vmem>>, vector<32x256xf32>,
    %c0_4 = arith.constant 0 : index
    %c0_5 = arith.constant 0 : index
    %c0_6 = arith.constant 0 : index
    %3 = vector.load %arg5[%c0_4, %c0_5, %c0_6] : memref<1x32x256xf32, #tpu.memory_space<vmem>>, vector<1x32x256xf32>
    %4 = vector.shape_cast %3 : vector<1x32x256xf32> to vector<32x256xf32>
    %c32 = arith.constant 32 : index
    %c0_7 = arith.constant 0 : index
    %5 = vector.load %arg9[%c32, %c0_7] : memref<96x256xf32, #tpu.memory_space<vmem>>, vector<32x256xf32>
    tpu.vector_store %arg9[%c32, %c0_7], %4 {strides = array<i32>} : memref<96x256xf32, #tpu.memory_space<vmem>>, vector<32x256xf32>,
    %c0_8 = arith.constant 0 : index
    %c0_9 = arith.constant 0 : index
    %c0_10 = arith.constant 0 : index
    %6 = vector.load %arg6[%c0_8, %c0_9, %c0_10] : memref<1x32x256xf32, #tpu.memory_space<vmem>>, vector<1x32x256xf32>
    %7 = vector.shape_cast %6 : vector<1x32x256xf32> to vector<32x256xf32>
    %c64 = arith.constant 64 : index
    %c0_11 = arith.constant 0 : index
    %8 = vector.load %arg9[%c64, %c0_11] : memref<96x256xf32, #tpu.memory_space<vmem>>, vector<32x256xf32>
    tpu.vector_store %arg9[%c64, %c0_11], %7 {strides = array<i32>} : memref<96x256xf32, #tpu.memory_space<vmem>>, vector<32x256xf32>,
    %c0_12 = arith.constant 0 : index
    %c0_13 = arith.constant 0 : index
    %9 = vector.load %arg2[%c0_12, %c0_13] : memref<32x96xf32, #tpu.memory_space<vmem>>, vector<32x96xf32>
    %c0_14 = arith.constant 0 : index
    %c0_15 = arith.constant 0 : index
    %10 = vector.load %arg9[%c0_14, %c0_15] : memref<96x256xf32, #tpu.memory_space<vmem>>, vector<96x256xf32>
    %cst = arith.constant dense<0.000000e+00> : vector<32x256xf32>
    %11 = tpu.matmul %9, %10, %cst {dimension_numbers = #tpu.dot_dimension_numbers<[1], [0], [0], [1], [0, 0, 1, 1], [], []>} : vector<32x96xf32>, vector<96x256xf32>, vector<32x256xf32> -> vector<32x256xf32>
    %c0_16 = arith.constant 0 : index
    %c0_17 = arith.constant 0 : index
    %12 = vector.load %arg3[%c0_16, %c0_17] : memref<32x1xf32, #tpu.memory_space<vmem>>, vector<32x1xf32>
    %13 = vector.broadcast %12 : vector<32x1xf32> to vector<32x256xf32>
    %14 = arith.addf %11, %13 : vector<32x256xf32>
    %c0_18 = arith.constant 0 : index
    %c0_19 = arith.constant 0 : index
    %c0_20 = arith.constant 0 : index
    %15 = vector.load %arg7[%c0_18, %c0_19, %c0_20] : memref<1x32x256xf32, #tpu.memory_space<vmem>>, vector<1x32x256xf32>
    %16 = vector.shape_cast %15 : vector<1x32x256xf32> to vector<32x256xf32>
    %17 = vector.shape_cast %14 : vector<32x256xf32> to vector<1x32x256xf32>
    tpu.vector_store %arg7[%c0_18, %c0_19, %c0_20], %17 {strides = array<i32>} : memref<1x32x256xf32, #tpu.memory_space<vmem>>, vector<1x32x256xf32>,
    %cst_21 = arith.constant dense<0.000000e+00> : vector<32xf32>
    %18 = vector.multi_reduction <add>, %14, %cst_21 [1] : vector<32x256xf32> to vector<32xf32>
    %19 = vector.shape_cast %18 : vector<32xf32> to vector<32x1xf32>
    %c0_22 = arith.constant 0 : index
    %c0_23 = arith.constant 0 : index
    %c0_24 = arith.constant 0 : index
    %c0_25 = arith.constant 0 : index
    %20 = vector.load %arg8[%c0_22, %c0_23, %c0_24, %c0_25] : memref<1x1x32x1xf32, #tpu.memory_space<vmem>>, vector<1x1x32x1xf32>
    %21 = vector.shape_cast %20 : vector<1x1x32x1xf32> to vector<32x1xf32>
    %22 = vector.shape_cast %19 : vector<32x1xf32> to vector<1x1x32x1xf32>
    tpu.vector_store %arg8[%c0_22, %c0_23, %c0_24, %c0_25], %22 {strides = array<i32>} : memref<1x1x32x1xf32, #tpu.memory_space<vmem>>, vector<1x1x32x1xf32>,
    return
  }
  func.func @transform_0(%arg0: i32, %arg1: i32) -> (i32, i32) {
    %c0_i32 = arith.constant 0 : i32
    %c0_i32_0 = arith.constant 0 : i32
    %c0_i32_1 = arith.constant 0 : i32
    return %c0_i32, %c0_i32_0 : i32, i32
  }
  func.func @transform_1(%arg0: i32, %arg1: i32) -> (i32, i32) {
    %c0_i32 = arith.constant 0 : i32
    %c0_i32_0 = arith.constant 0 : i32
    %c0_i32_1 = arith.constant 0 : i32
    return %c0_i32, %c0_i32_0 : i32, i32
  }
  func.func @transform_2(%arg0: i32, %arg1: i32) -> (i32, i32, i32) {
    %c0_i32 = arith.constant 0 : i32
    %c0_i32_0 = arith.constant 0 : i32
    return %arg1, %c0_i32, %arg0 : i32, i32, i32
  }
  func.func @transform_3(%arg0: i32, %arg1: i32) -> (i32, i32, i32) {
    %c0_i32 = arith.constant 0 : i32
    %c0_i32_0 = arith.constant 0 : i32
    return %arg1, %c0_i32, %arg0 : i32, i32, i32
  }
  func.func @transform_4(%arg0: i32, %arg1: i32) -> (i32, i32, i32) {
    %c0_i32 = arith.constant 0 : i32
    %c0_i32_0 = arith.constant 0 : i32
    return %arg1, %c0_i32, %arg0 : i32, i32, i32
  }
  func.func @transform_5(%arg0: i32, %arg1: i32) -> (i32, i32, i32) {
    %c0_i32 = arith.constant 0 : i32
    %c0_i32_0 = arith.constant 0 : i32
    return %arg1, %c0_i32, %arg0 : i32, i32, i32
  }
  func.func @transform_6(%arg0: i32, %arg1: i32) -> (i32, i32, i32, i32) {
    %c0_i32 = arith.constant 0 : i32
    %c0_i32_0 = arith.constant 0 : i32
    %c0_i32_1 = arith.constant 0 : i32
    return %arg1, %arg0, %c0_i32, %c0_i32_0 : i32, i32, i32, i32
  }
}

</mosaic_0001>

<llo_original>
// kernel: _lambda_.1
$region0: #{_lambda_.1}
  #allocation0 [shape = 'u32[]', space=smem, size = 0x4, offset = 0x4, fixed_abs, tag = 'smem constant byte address 0x4 - core index']
  #allocation1 [shape = 'u32[144,128]{1,0:T(1,128)}', space=vmem, size = 0x12000, scoped, tag = 'internal scratch']
  #allocation2 [shape = 'f32[96,256]{1,0:T(8,128)}', space=vmem, size = 0x18000, scoped, tag = 'scratch operand']
  %s0 = inlined_call_operand.vmem [shape: f32[32,96], index: 0, kind: input, shape index: {}]
  %s1 = inlined_call_operand.vmem [shape: f32[32,1], index: 1, kind: input, shape index: {}]
  %s2 = inlined_call_operand.vmem [shape: f32[2,32,256], index: 2, kind: input, shape index: {}]
  %s3 = inlined_call_operand.vmem [shape: f32[2,32,256], index: 3, kind: input, shape index: {}]
  %s4 = inlined_call_operand.vmem [shape: f32[2,32,256], index: 4, kind: input, shape index: {}]
  %s5 = inlined_call_operand.vmem [shape: f32[2,32,256], index: 5, kind: output, shape index: {0}]
  %s6 = inlined_call_operand.vmem [shape: f32[2,1,32,1], index: 6, kind: output, shape index: {1}]
  %7 = xla_tuple %s5, %s6
  %s8 = sld [smem:[#allocation0]]
  $region61: #{_lambda_.1} parent=0
    _
  %s10 = ssub.s32 1, %s8
  %s11 = scalar_select 0, %s10, %s8
  loop: start=0, step=1, limit=4
  $region2: #{_lambda_.1} parent=0 // loop_pre_header
    _
  $region3: #{_lambda_.1} parent=0 // loop_header
    %s13 = sphi 0, %s17
    %p14 = scmp.ge.s32.totalorder %s13, 4
    %s20 = sphi 0, %s32
    %s21 = sphi 0, %s28
    %s22 = sphi 0, %s20
    %s23 = sphi 0, %s21
    %s24 = sphi 0, %s22
    %s25 = sphi 0, %s23
    %s33 = sphi 0, %s33
    %s35 = sphi 0, %s33
    %s36 = sphi 0, %s35
    %s50 = sphi 0, %s36
    %s54 = sphi 0, %s54
    %s56 = sphi 0, %s54
    %s57 = sphi 0, %s56
    %s71 = sphi 0, %s57
    %s79 = sphi 0, %s81
    %s82 = sphi 0, %s79
    %s83 = sphi 0, %s82
    %s99 = sphi 0, %s83
    %s107 = sphi 0, %s109
    %s110 = sphi 0, %s107
    %s111 = sphi 0, %s110
    %s127 = sphi 0, %s111
    %s135 = sphi 0, %s137
    %s138 = sphi 0, %s135
    %s139 = sphi 0, %s138
    %s155 = sphi 0, %s139
    %s163 = sphi 0, %s165
    %s166 = sphi 0, %s163
    %s167 = sphi 0, %s166
    %s183 = sphi 0, %s167
    %s191 = sphi 0, %s193
    %s194 = sphi 0, %s191
    %s195 = sphi 0, %s194
    %s211 = sphi 0, %s195
  $region4: #{_lambda_.1} parent=0 // loop_header_branch
    %16 = sbr.rel (%p14) target = $region8
  $region5: #{_lambda_.1} parent=0 // loop_body
    %s18 = ssub.s32 %s13, 1
    %s19 = ssub.s32 %s13, 2
    %s26 = sadd.s32 1, %s21
    %p27 = scmp.ge.s32.totalorder %s26, 2
    %s28 = scalar_select %p27, 0, %s26
    %s29 = sadd.s32 1, %s20
    %s30 = scalar_select %p27, %s29, %s20
    %p31 = scmp.ge.s32.totalorder %s30, 1
    %s32 = scalar_select %p31, 0, %s30
    %s34 = sadd.s32 %s33, 1
    %p37 = scmp.eq.s32.totalorder %s13, 1
    %p38 = scmp.ne.s32.totalorder %s33, %s35
    %p39 = scmp.eq.s32.totalorder %s13, 0
    %p40 = por %p38, %p39
    %p41 = scmp.ne.s32.totalorder %s33, %s35
    %p42 = scmp.eq.s32.totalorder %s18, 1
    %p43 = por %p41, %p42
    %p44 = scmp.ne.s32.totalorder %s35, %s36
    %p45 = scmp.eq.s32.totalorder %s18, 0
    %p46 = por %p44, %p45
    %p47 = scmp.ne.s32.totalorder %s35, %s36
    %p48 = scmp.eq.s32.totalorder %s19, 1
    %p49 = por %p47, %p48
    %p51 = scmp.ne.s32.totalorder %s36, %s50
    %p52 = scmp.eq.s32.totalorder %s19, 0
    %p53 = por %p51, %p52
    %s55 = sadd.s32 %s54, 1
    %p58 = scmp.eq.s32.totalorder %s13, 1
    %p59 = scmp.ne.s32.totalorder %s54, %s56
    %p60 = scmp.eq.s32.totalorder %s13, 0
    %p61 = por %p59, %p60
    %p62 = scmp.ne.s32.totalorder %s54, %s56
    %p63 = scmp.eq.s32.totalorder %s18, 1
    %p64 = por %p62, %p63
    %p65 = scmp.ne.s32.totalorder %s56, %s57
    %p66 = scmp.eq.s32.totalorder %s18, 0
    %p67 = por %p65, %p66
    %p68 = scmp.ne.s32.totalorder %s56, %s57
    %p69 = scmp.eq.s32.totalorder %s19, 1
    %p70 = por %p68, %p69
    %p72 = scmp.ne.s32.totalorder %s57, %s71
    %p73 = scmp.eq.s32.totalorder %s19, 0
    %p74 = por %p72, %p73
    %s75 = ssub.s32 %s21, %s28
    %s76 = ssub.s32 %s20, %s32
    %s77 = sor.u32 %s75, %s76
    %p78 = scmp.eq.s32.totalorder %s77, 0
    %s80 = sadd.s32 %s79, 1
    %s81 = scalar_select %p78, %s79, %s80
    %p84 = pneg %p78
    %p85 = scmp.eq.s32.totalorder %s13, 1
    %p86 = por %p84, %p85
    %p87 = scmp.ne.s32.totalorder %s79, %s82
    %p88 = scmp.eq.s32.totalorder %s13, 0
    %p89 = por %p87, %p88
    %p90 = scmp.ne.s32.totalorder %s79, %s82
    %p91 = scmp.eq.s32.totalorder %s18, 1
    %p92 = por %p90, %p91
    %p93 = scmp.ne.s32.totalorder %s82, %s83
    %p94 = scmp.eq.s32.totalorder %s18, 0
    %p95 = por %p93, %p94
    %p96 = scmp.ne.s32.totalorder %s82, %s83
    %p97 = scmp.eq.s32.totalorder %s19, 1
    %p98 = por %p96, %p97
    %p100 = scmp.ne.s32.totalorder %s83, %s99
    %p101 = scmp.eq.s32.totalorder %s19, 0
    %p102 = por %p100, %p101
    %s103 = ssub.s32 %s21, %s28
    %s104 = ssub.s32 %s20, %s32
    %s105 = sor.u32 %s103, %s104
    %p106 = scmp.eq.s32.totalorder %s105, 0
    %s108 = sadd.s32 %s107, 1
    %s109 = scalar_select %p106, %s107, %s108
    %p112 = pneg %p106
    %p113 = scmp.eq.s32.totalorder %s13, 1
    %p114 = por %p112, %p113
    %p115 = scmp.ne.s32.totalorder %s107, %s110
    %p116 = scmp.eq.s32.totalorder %s13, 0
    %p117 = por %p115, %p116
    %p118 = scmp.ne.s32.totalorder %s107, %s110
    %p119 = scmp.eq.s32.totalorder %s18, 1
    %p120 = por %p118, %p119
    %p121 = scmp.ne.s32.totalorder %s110, %s111
    %p122 = scmp.eq.s32.totalorder %s18, 0
    %p123 = por %p121, %p122
    %p124 = scmp.ne.s32.totalorder %s110, %s111
    %p125 = scmp.eq.s32.totalorder %s19, 1
    %p126 = por %p124, %p125
    %p128 = scmp.ne.s32.totalorder %s111, %s127
    %p129 = scmp.eq.s32.totalorder %s19, 0
    %p130 = por %p128, %p129
    %s131 = ssub.s32 %s21, %s28
    %s132 = ssub.s32 %s20, %s32
    %s133 = sor.u32 %s131, %s132
    %p134 = scmp.eq.s32.totalorder %s133, 0
    %s136 = sadd.s32 %s135, 1
    %s137 = scalar_select %p134, %s135, %s136
    %p140 = pneg %p134
    %p141 = scmp.eq.s32.totalorder %s13, 1
    %p142 = por %p140, %p141
    %p143 = scmp.ne.s32.totalorder %s135, %s138
    %p144 = scmp.eq.s32.totalorder %s13, 0
    %p145 = por %p143, %p144
    %p146 = scmp.ne.s32.totalorder %s135, %s138
    %p147 = scmp.eq.s32.totalorder %s18, 1
    %p148 = por %p146, %p147
    %p149 = scmp.ne.s32.totalorder %s138, %s139
    %p150 = scmp.eq.s32.totalorder %s18, 0
    %p151 = por %p149, %p150
    %p152 = scmp.ne.s32.totalorder %s138, %s139
    %p153 = scmp.eq.s32.totalorder %s19, 1
    %p154 = por %p152, %p153
    %p156 = scmp.ne.s32.totalorder %s139, %s155
    %p157 = scmp.eq.s32.totalorder %s19, 0
    %p158 = por %p156, %p157
    %s159 = ssub.s32 %s21, %s28
    %s160 = ssub.s32 %s20, %s32
    %s161 = sor.u32 %s159, %s160
    %p162 = scmp.eq.s32.totalorder %s161, 0
    %s164 = sadd.s32 %s163, 1
    %s165 = scalar_select %p162, %s163, %s164
    %p168 = pneg %p162
    %p169 = scmp.eq.s32.totalorder %s13, 1
    %p170 = por %p168, %p169
    %p171 = scmp.ne.s32.totalorder %s163, %s166
    %p172 = scmp.eq.s32.totalorder %s13, 0
    %p173 = por %p171, %p172
    %p174 = scmp.ne.s32.totalorder %s163, %s166
    %p175 = scmp.eq.s32.totalorder %s18, 1
    %p176 = por %p174, %p175
    %p177 = scmp.ne.s32.totalorder %s166, %s167
    %p178 = scmp.eq.s32.totalorder %s18, 0
    %p179 = por %p177, %p178
    %p180 = scmp.ne.s32.totalorder %s166, %s167
    %p181 = scmp.eq.s32.totalorder %s19, 1
    %p182 = por %p180, %p181
    %p184 = scmp.ne.s32.totalorder %s167, %s183
    %p185 = scmp.eq.s32.totalorder %s19, 0
    %p186 = por %p184, %p185
    %s187 = ssub.s32 %s21, %s28
    %s188 = ssub.s32 %s20, %s32
    %s189 = sor.u32 %s187, %s188
    %p190 = scmp.eq.s32.totalorder %s189, 0
    %s192 = sadd.s32 %s191, 1
    %s193 = scalar_select %p190, %s191, %s192
    %p196 = pneg %p190
    %p197 = scmp.eq.s32.totalorder %s13, 1
    %p198 = por %p196, %p197
    %p199 = scmp.ne.s32.totalorder %s191, %s194
    %p200 = scmp.eq.s32.totalorder %s13, 0
    %p201 = por %p199, %p200
    %p202 = scmp.ne.s32.totalorder %s191, %s194
    %p203 = scmp.eq.s32.totalorder %s18, 1
    %p204 = por %p202, %p203
    %p205 = scmp.ne.s32.totalorder %s194, %s195
    %p206 = scmp.eq.s32.totalorder %s18, 0
    %p207 = por %p205, %p206
    %p208 = scmp.ne.s32.totalorder %s194, %s195
    %p209 = scmp.eq.s32.totalorder %s19, 1
    %p210 = por %p208, %p209
    %p212 = scmp.ne.s32.totalorder %s195, %s211
    %p213 = scmp.eq.s32.totalorder %s19, 0
    %p214 = por %p212, %p213
    %p215 = scmp.le.s32.totalorder 1, %s13
    %p216 = scmp.lt.s32.totalorder %s13, 3
    %p217 = pnand %p215, %p216
    %p218 = pneg %p217
    // Predicated region
    $region9: #{_lambda_.1} parent=5 // pred_check
      _
    $region10: #{_lambda_.1} parent=5 // pred_check_branch
      %220 = sbr.rel (%p217) target = $region12
    $region11: #{_lambda_.1} parent=5 // pred_region
      %s221 = ssub.s32 %s13, 1
      // Predicated region
      $region13: #{_lambda_.1} parent=11 // pred_check
        %p222 = pneg %p46
      $region14: #{_lambda_.1} parent=11 // pred_check_branch
        %224 = sbr.rel (%p222) target = $region16
      $region15: #{_lambda_.1} parent=11 // pred_region
        _
      $region16: #{_lambda_.1} parent=11 // pred_fallthru
        _
      // Predicated region
      $region17: #{_lambda_.1} parent=11 // pred_check
        %p225 = pneg %p67
      $region18: #{_lambda_.1} parent=11 // pred_check_branch
        %227 = sbr.rel (%p225) target = $region20
      $region19: #{_lambda_.1} parent=11 // pred_region
        _
      $region20: #{_lambda_.1} parent=11 // pred_fallthru
        _
    $region12: #{_lambda_.1} parent=5 // pred_fallthru
      _
    %p228 = scmp.lt.s32.totalorder %s13, 2
    // Predicated region
    $region21: #{_lambda_.1} parent=5 // pred_check
      %p229 = pneg %p228
    $region22: #{_lambda_.1} parent=5 // pred_check_branch
      %231 = sbr.rel (%p229) target = $region24
    $region23: #{_lambda_.1} parent=5 // pred_region
      // Predicated region
      $region25: #{_lambda_.1} parent=23 // pred_check
        %p232 = pneg %p89
      $region26: #{_lambda_.1} parent=23 // pred_check_branch
        %234 = sbr.rel (%p232) target = $region28
      $region27: #{_lambda_.1} parent=23 // pred_region
        %s235 = smul.u32 2, %s20
        %p236 = scmp.lt.s32.totalorder %s21, 1
        %s237 = scalar_select %p236, %s21, 1
        %p238 = scmp.lt.s32.totalorder %s235, 1
        %s239 = scalar_select %p238, %s235, 1
        %s240 = smul.addr %s237, 8
        %s241 = sadd.s32 %s239, %s240
        %s242 = smul.addr %s241, 8
        %s243 = scalar_lea.vmem %s2, %s242
        %s244 = smul.u32 2, %s20
      $region28: #{_lambda_.1} parent=23 // pred_fallthru
        _
      // Predicated region
      $region29: #{_lambda_.1} parent=23 // pred_check
        %p245 = pneg %p117
      $region30: #{_lambda_.1} parent=23 // pred_check_branch
        %247 = sbr.rel (%p245) target = $region32
      $region31: #{_lambda_.1} parent=23 // pred_region
        %s248 = smul.u32 2, %s20
        %p249 = scmp.lt.s32.totalorder %s21, 1
        %s250 = scalar_select %p249, %s21, 1
        %p251 = scmp.lt.s32.totalorder %s248, 1
        %s252 = scalar_select %p251, %s248, 1
        %s253 = smul.addr %s250, 8
        %s254 = sadd.s32 %s252, %s253
        %s255 = smul.addr %s254, 8
        %s256 = scalar_lea.vmem %s3, %s255
        %s257 = smul.u32 2, %s20
      $region32: #{_lambda_.1} parent=23 // pred_fallthru
        _
      // Predicated region
      $region33: #{_lambda_.1} parent=23 // pred_check
        %p258 = pneg %p145
      $region34: #{_lambda_.1} parent=23 // pred_check_branch
        %260 = sbr.rel (%p258) target = $region36
      $region35: #{_lambda_.1} parent=23 // pred_region
        %s261 = smul.u32 2, %s20
        %p262 = scmp.lt.s32.totalorder %s21, 1
        %s263 = scalar_select %p262, %s21, 1
        %p264 = scmp.lt.s32.totalorder %s261, 1
        %s265 = scalar_select %p264, %s261, 1
        %s266 = smul.addr %s263, 8
        %s267 = sadd.s32 %s265, %s266
        %s268 = smul.addr %s267, 8
        %s269 = scalar_lea.vmem %s4, %s268
        %s270 = smul.u32 2, %s20
      $region36: #{_lambda_.1} parent=23 // pred_fallthru
        _
    $region24: #{_lambda_.1} parent=5 // pred_fallthru
      _
    %p271 = scmp.le.s32.totalorder 1, %s13
    %p272 = scmp.lt.s32.totalorder %s13, 3
    %p273 = pnand %p271, %p272
    %p274 = pneg %p273
    // Predicated region
    $region37: #{_lambda_.1} parent=5 // pred_check
      _
    $region38: #{_lambda_.1} parent=5 // pred_check_branch
      %276 = sbr.rel (%p273) target = $region40
    $region39: #{_lambda_.1} parent=5 // pred_region
      %s277 = ssub.s32 %s13, 1
      %p278 = pneg %p46
      %p279 = pneg %p43
      %p280 = pneg %p67
      %p281 = pneg %p64
      %s282 = smul.u32 2, %s22
      %p283 = scmp.lt.s32.totalorder %s23, 1
      %s284 = scalar_select %p283, %s23, 1
      %p285 = scmp.lt.s32.totalorder %s282, 1
      %s286 = scalar_select %p285, %s282, 1
      %s287 = smul.addr %s284, 8
      %s288 = sadd.s32 %s286, %s287
      %s289 = smul.addr %s288, 8
      %s290 = scalar_lea.vmem %s2, %s289
      %p291 = pneg %p95
      %p292 = pneg %p92
      %s293 = smul.u32 2, %s22
      %p294 = scmp.lt.s32.totalorder %s23, 1
      %s295 = scalar_select %p294, %s23, 1
      %p296 = scmp.lt.s32.totalorder %s293, 1
      %s297 = scalar_select %p296, %s293, 1
      %s298 = smul.addr %s295, 8
      %s299 = sadd.s32 %s297, %s298
      %s300 = smul.addr %s299, 8
      %s301 = scalar_lea.vmem %s3, %s300
      %p302 = pneg %p123
      %p303 = pneg %p120
      %s304 = smul.u32 2, %s22
      %p305 = scmp.lt.s32.totalorder %s23, 1
      %s306 = scalar_select %p305, %s23, 1
      %p307 = scmp.lt.s32.totalorder %s304, 1
      %s308 = scalar_select %p307, %s304, 1
      %s309 = smul.addr %s306, 8
      %s310 = sadd.s32 %s308, %s309
      %s311 = smul.addr %s310, 8
      %s312 = scalar_lea.vmem %s4, %s311
      %p313 = pneg %p151
      %p314 = pneg %p148
      %p315 = pneg %p179
      %p316 = pneg %p176
      %s317 = smul.u32 2, %s22
      %p318 = scmp.lt.s32.totalorder %s23, 1
      %s319 = scalar_select %p318, %s23, 1
      %p320 = scmp.lt.s32.totalorder %s317, 1
      %s321 = scalar_select %p320, %s317, 1
      %s322 = smul.addr %s319, 8
      %s323 = sadd.s32 %s321, %s322
      %s324 = smul.addr %s323, 8
      %s325 = scalar_lea.vmem %s5, %s324
      %p326 = pneg %p207
      %p327 = pneg %p204
      %p328 = scmp.lt.s32.totalorder %s23, 1
      %s329 = scalar_select %p328, %s23, 1
      %p330 = scmp.lt.s32.totalorder %s22, 0
      %s331 = scalar_select %p330, %s22, 0
      %s332 = smul.addr %s331, 4
      %s333 = smul.addr %s329, 4
      %s334 = sadd.s32 %s332, %s333
      %s335 = smul.addr %s334, 8
      %s336 = scalar_lea.vmem %s6, %s335
      %s337 = smul.u32 2, %s22
      %p338 = scmp.lt.s32.totalorder %s23, 1
      %s339 = scalar_select %p338, %s23, 1
      %p340 = scmp.lt.s32.totalorder %s337, 1
      %s341 = scalar_select %p340, %s337, 1
      %s342 = smul.addr %s339, 8
      %s343 = sadd.s32 %s341, %s342
      %s344 = smul.addr %s343, 8
      %s345 = scalar_lea.vmem %s2, %s344
      %s346 = smul.u32 2, %s22
      %s347 = smul.u32 2, %s22
      %p348 = scmp.lt.s32.totalorder %s23, 1
      %s349 = scalar_select %p348, %s23, 1
      %p350 = scmp.lt.s32.totalorder %s347, 1
      %s351 = scalar_select %p350, %s347, 1
      %s352 = smul.addr %s349, 8
      %s353 = sadd.s32 %s351, %s352
      %s354 = smul.addr %s353, 8
      %s355 = scalar_lea.vmem %s3, %s354
      %s356 = smul.u32 2, %s22
      %s357 = smul.u32 2, %s22
      %p358 = scmp.lt.s32.totalorder %s23, 1
      %s359 = scalar_select %p358, %s23, 1
      %p360 = scmp.lt.s32.totalorder %s357, 1
      %s361 = scalar_select %p360, %s357, 1
      %s362 = smul.addr %s359, 8
      %s363 = sadd.s32 %s361, %s362
      %s364 = smul.addr %s363, 8
      %s365 = scalar_lea.vmem %s4, %s364
      %s366 = smul.u32 2, %s22
      %s367 = smul.u32 2, %s22
      %p368 = scmp.lt.s32.totalorder %s23, 1
      %s369 = scalar_select %p368, %s23, 1
      %p370 = scmp.lt.s32.totalorder %s367, 1
      %s371 = scalar_select %p370, %s367, 1
      %s372 = smul.addr %s369, 8
      %s373 = sadd.s32 %s371, %s372
      %s374 = smul.addr %s373, 8
      %s375 = scalar_lea.vmem %s5, %s374
      %s376 = smul.u32 2, %s22
      %p377 = scmp.lt.s32.totalorder %s23, 1
      %s378 = scalar_select %p377, %s23, 1
      %p379 = scmp.lt.s32.totalorder %s22, 0
      %s380 = scalar_select %p379, %s22, 0
      %s381 = smul.addr %s380, 4
      %s382 = smul.addr %s378, 4
      %s383 = sadd.s32 %s381, %s382
      %s384 = smul.addr %s383, 8
      %s385 = scalar_lea.vmem %s6, %s384
      %v386 = vld [vmem:[%s345] sm:$0xff]
      %v387 = vld [vmem:[%s345 + $0x8] sm:$0xff]
      %v388 = vld [vmem:[%s345 + $0x10] sm:$0xff]
      %v389 = vld [vmem:[%s345 + $0x18] sm:$0xff]
      %v390 = vld [vmem:[%s345 + $0x20] sm:$0xff]
      %v391 = vld [vmem:[%s345 + $0x28] sm:$0xff]
      %v392 = vld [vmem:[%s345 + $0x30] sm:$0xff]
      %v393 = vld [vmem:[%s345 + $0x38] sm:$0xff]
      %394 = vst [vmem:[#allocation2] sm:$0xff] %v386
      %395 = vst [vmem:[#allocation2 + $0x8] sm:$0xff] %v387
      %396 = vst [vmem:[#allocation2 + $0x10] sm:$0xff] %v388
      %397 = vst [vmem:[#allocation2 + $0x18] sm:$0xff] %v389
      %398 = vst [vmem:[#allocation2 + $0x20] sm:$0xff] %v390
      %399 = vst [vmem:[#allocation2 + $0x28] sm:$0xff] %v391
      %400 = vst [vmem:[#allocation2 + $0x30] sm:$0xff] %v392
      %401 = vst [vmem:[#allocation2 + $0x38] sm:$0xff] %v393
      %v402 = vld [vmem:[%s355] sm:$0xff]
      %v403 = vld [vmem:[%s355 + $0x8] sm:$0xff]
      %v404 = vld [vmem:[%s355 + $0x10] sm:$0xff]
      %v405 = vld [vmem:[%s355 + $0x18] sm:$0xff]
      %v406 = vld [vmem:[%s355 + $0x20] sm:$0xff]
      %v407 = vld [vmem:[%s355 + $0x28] sm:$0xff]
      %v408 = vld [vmem:[%s355 + $0x30] sm:$0xff]
      %v409 = vld [vmem:[%s355 + $0x38] sm:$0xff]
      %410 = vst [vmem:[#allocation2 + $0x40] sm:$0xff] %v402
      %411 = vst [vmem:[#allocation2 + $0x48] sm:$0xff] %v403
      %412 = vst [vmem:[#allocation2 + $0x50] sm:$0xff] %v404
      %413 = vst [vmem:[#allocation2 + $0x58] sm:$0xff] %v405
      %414 = vst [vmem:[#allocation2 + $0x60] sm:$0xff] %v406
      %415 = vst [vmem:[#allocation2 + $0x68] sm:$0xff] %v407
      %416 = vst [vmem:[#allocation2 + $0x70] sm:$0xff] %v408
      %417 = vst [vmem:[#allocation2 + $0x78] sm:$0xff] %v409
      %v418 = vld [vmem:[%s365] sm:$0xff]
      %v419 = vld [vmem:[%s365 + $0x8] sm:$0xff]
      %v420 = vld [vmem:[%s365 + $0x10] sm:$0xff]
      %v421 = vld [vmem:[%s365 + $0x18] sm:$0xff]
      %v422 = vld [vmem:[%s365 + $0x20] sm:$0xff]
      %v423 = vld [vmem:[%s365 + $0x28] sm:$0xff]
      %v424 = vld [vmem:[%s365 + $0x30] sm:$0xff]
      %v425 = vld [vmem:[%s365 + $0x38] sm:$0xff]
      %426 = vst [vmem:[#allocation2 + $0x80] sm:$0xff] %v418
      %427 = vst [vmem:[#allocation2 + $0x88] sm:$0xff] %v419
      %428 = vst [vmem:[#allocation2 + $0x90] sm:$0xff] %v420
      %429 = vst [vmem:[#allocation2 + $0x98] sm:$0xff] %v421
      %430 = vst [vmem:[#allocation2 + $0xa0] sm:$0xff] %v422
      %431 = vst [vmem:[#allocation2 + $0xa8] sm:$0xff] %v423
      %432 = vst [vmem:[#allocation2 + $0xb0] sm:$0xff] %v424
      %433 = vst [vmem:[#allocation2 + $0xb8] sm:$0xff] %v425
      %v434 = vld [vmem:[%s0] sm:$0xff]
      %v435 = vld [vmem:[%s0 + $0x8] sm:$0xff]
      %v436 = vld [vmem:[%s0 + $0x10] sm:$0xff]
      %v437 = vld [vmem:[%s0 + $0x18] sm:$0xff]
      %v438 = vld [vmem:[#allocation2] sm:$0xff]
      %v439 = vld [vmem:[#allocation2 + $0x8] sm:$0xff]
      %v440 = vld [vmem:[#allocation2 + $0x10] sm:$0xff]
      %v441 = vld [vmem:[#allocation2 + $0x18] sm:$0xff]
      %v442 = vld [vmem:[#allocation2 + $0x20] sm:$0xff]
      %v443 = vld [vmem:[#allocation2 + $0x28] sm:$0xff]
      %v444 = vld [vmem:[#allocation2 + $0x30] sm:$0xff]
      %v445 = vld [vmem:[#allocation2 + $0x38] sm:$0xff]
      %v446 = vld [vmem:[#allocation2 + $0x40] sm:$0xff]
      %v447 = vld [vmem:[#allocation2 + $0x48] sm:$0xff]
      %v448 = vld [vmem:[#allocation2 + $0x50] sm:$0xff]
      %v449 = vld [vmem:[#allocation2 + $0x58] sm:$0xff]
      %v450 = vld [vmem:[#allocation2 + $0x60] sm:$0xff]
      %v451 = vld [vmem:[#allocation2 + $0x68] sm:$0xff]
      %v452 = vld [vmem:[#allocation2 + $0x70] sm:$0xff]
      %v453 = vld [vmem:[#allocation2 + $0x78] sm:$0xff]
      %v454 = vld [vmem:[#allocation2 + $0x80] sm:$0xff]
      %v455 = vld [vmem:[#allocation2 + $0x88] sm:$0xff]
      %v456 = vld [vmem:[#allocation2 + $0x90] sm:$0xff]
      %v457 = vld [vmem:[#allocation2 + $0x98] sm:$0xff]
      %v458 = vld [vmem:[#allocation2 + $0xa0] sm:$0xff]
      %v459 = vld [vmem:[#allocation2 + $0xa8] sm:$0xff]
      %v460 = vld [vmem:[#allocation2 + $0xb0] sm:$0xff]
      %v461 = vld [vmem:[#allocation2 + $0xb8] sm:$0xff]
      %v462 = vld [vmem:[%s1] sm:$0xff]
      %v463 = vld [vmem:[%s1 + $0x8] sm:$0xff]
      %v464 = vld [vmem:[%s1 + $0x10] sm:$0xff]
      %v465 = vld [vmem:[%s1 + $0x18] sm:$0xff]
      %467 = vset.pattern.permute.xlu0 0
      %468 = vperm.xlu0 %467, %v462
      %v469 = vpop.permute.xlu0 %468
      %472 = vset.pattern.permute.xlu0 0
      %473 = vperm.xlu0 %472, %v463
      %v474 = vpop.permute.xlu0 %473
      %477 = vset.pattern.permute.xlu0 0
      %478 = vperm.xlu0 %477, %v464
      %v479 = vpop.permute.xlu0 %478
      %482 = vset.pattern.permute.xlu0 0
      %483 = vperm.xlu0 %482, %v465
      %v484 = vpop.permute.xlu0 %483
      %vm486 = vcmask 785408
      %v488 = vsel %vm486, %v434, 0
      %v491 = vsel %vm486, %v435, 0
      %v494 = vsel %vm486, %v436, 0
      %v497 = vsel %vm486, %v437, 0
      %499 = vmatprep.subr.mxu0 %v439
      %500 = vmatpush1.msra.mxu0 %v438
      %501 = vmatprep.subr.mxu0 %v441
      %502 = vmatpush1.msra.mxu0 %v440
      %503 = vmatprep.subr.mxu0 %v443
      %504 = vmatpush1.msra.mxu0 %v442
      %505 = vmatprep.subr.mxu0 %v445
      %506 = vmatpush1.msra.mxu0 %v444
      %507 = vmatprep.subr.mxu0 %v447
      %508 = vmatpush1.msra.mxu0 %v446
      %509 = vmatprep.subr.mxu0 %v449
      %510 = vmatpush1.msra.mxu0 %v448
      %511 = vmatprep.subr.mxu0 %v451
      %512 = vmatpush1.msra.mxu0 %v450
      %513 = vmatprep.subr.mxu0 %v453
      %514 = vmatpush1.msra.mxu0 %v452
      %515 = vmatprep.subr.mxu0 %v455
      %516 = vmatpush1.msra.mxu0 %v454
      %517 = vmatprep.subr.mxu0 %v457
      %518 = vmatpush1.msra.mxu0 %v456
      %519 = vmatprep.subr.mxu0 %v459
      %520 = vmatpush1.msra.mxu0 %v458
      %521 = vmatprep.subr.mxu0 %v461
      %522 = vmatpush1.msra.mxu0 %v460
      %523 = vmatprep.subr.mxu0 0.0
      %524 = vmatpush1.msra.mxu0 0.0
      %525 = vmatprep.subr.mxu0 0.0
      %526 = vmatpush1.msra.mxu0 0.0
      %527 = vmatprep.subr.mxu0 0.0
      %528 = vmatpush1.msra.mxu0 0.0
      %529 = vmatprep.subr.mxu0 0.0
      %530 = vmatpush1.msra.mxu0 0.0
      %531 = vmatprep.subr.mxu0 0.0
      %532 = vmatpush1.msra.mxu0 0.0
      %533 = vmatprep.subr.mxu0 0.0
      %534 = vmatpush1.msra.mxu0 0.0
      %535 = vmatprep.subr.mxu0 0.0
      %536 = vmatpush1.msra.mxu0 0.0
      %537 = vmatprep.subr.mxu0 0.0
      %538 = vmatpush1.msra.mxu0 0.0
      %539 = vmatprep.subr.mxu0 0.0
      %540 = vmatpush1.msra.mxu0 0.0
      %541 = vmatprep.subr.mxu0 0.0
      %542 = vmatpush1.msra.mxu0 0.0
      %543 = vmatprep.subr.mxu0 0.0
      %544 = vmatpush1.msra.mxu0 0.0
      %545 = vmatprep.subr.mxu0 0.0
      %546 = vmatpush1.msra.mxu0 0.0
      %547 = vmatprep.subr.mxu0 0.0
      %548 = vmatpush1.msra.mxu0 0.0
      %549 = vmatprep.subr.mxu0 0.0
      %550 = vmatpush1.msra.mxu0 0.0
      %551 = vmatprep.subr.mxu0 0.0
      %552 = vmatpush1.msra.mxu0 0.0
      %553 = vmatprep.subr.mxu0 0.0
      %554 = vmatpush1.msra.mxu0 0.0
      %555 = vmatprep.subr.mxu0 0.0
      %556 = vmatpush1.msra.mxu0 0.0
      %557 = vmatprep.subr.mxu0 0.0
      %558 = vmatpush1.msra.mxu0 0.0
      %559 = vmatprep.subr.mxu0 0.0
      %560 = vmatpush1.msra.mxu0 0.0
      %561 = vmatprep.subr.mxu0 0.0
      %562 = vmatpush1.msra.mxu0 0.0
      %563 = vmatprep.mubr.f32.mxu0 0.0
      %564 = vmatmul.mubr.f32.gmra.mrb[0].mxu0 %v488
      %v565 = vpop.f32.mrb[0].mxu0
      %v566 = vadd.f32 %v469, %v565
      %v567 = vpop.f32.mrb[0].mxu0
      %v568 = vadd.f32 %v469, %v567
      %569 = vmatprep.mubr.f32.mxu0 0.0
      %570 = vmatmul.mubr.f32.gmra.mrb[0].mxu0 %v491
      %v571 = vpop.f32.mrb[0].mxu0
      %v572 = vadd.f32 %v474, %v571
      %v573 = vpop.f32.mrb[0].mxu0
      %v574 = vadd.f32 %v474, %v573
      %575 = vmatprep.mubr.f32.mxu0 0.0
      %576 = vmatmul.mubr.f32.gmra.mrb[0].mxu0 %v494
      %v577 = vpop.f32.mrb[0].mxu0
      %v578 = vadd.f32 %v479, %v577
      %v579 = vpop.f32.mrb[0].mxu0
      %v580 = vadd.f32 %v479, %v579
      %581 = vmatprep.mubr.f32.mxu0 0.0
      %582 = vmatmul.mubr.f32.gmra.mrb[0].mxu0 %v497
      %v583 = vpop.f32.mrb[0].mxu0
      %v584 = vadd.f32 %v484, %v583
      %v585 = vpop.f32.mrb[0].mxu0
      %v586 = vadd.f32 %v484, %v585
      %587 = vdwg.mxu0
      %588 = vst [vmem:[%s375] sm:$0xff] %v566
      %589 = vst [vmem:[%s375 + $0x8] sm:$0xff] %v568
      %590 = vst [vmem:[%s375 + $0x10] sm:$0xff] %v572
      %591 = vst [vmem:[%s375 + $0x18] sm:$0xff] %v574
      %592 = vst [vmem:[%s375 + $0x20] sm:$0xff] %v578
      %593 = vst [vmem:[%s375 + $0x28] sm:$0xff] %v580
      %594 = vst [vmem:[%s375 + $0x30] sm:$0xff] %v584
      %595 = vst [vmem:[%s375 + $0x38] sm:$0xff] %v586
      %v596 = vadd.f32 %v566, %v568
      %597 = vadd.xlane.f32.xlu0 %v596
      %v598 = vpop.xlane.xlu0 %597
      %v599 = vadd.f32 %v572, %v574
      %600 = vadd.xlane.f32.xlu0 %v599
      %v601 = vpop.xlane.xlu0 %600
      %v602 = vadd.f32 %v578, %v580
      %603 = vadd.xlane.f32.xlu0 %v602
      %v604 = vpop.xlane.xlu0 %603
      %v605 = vadd.f32 %v584, %v586
      %606 = vadd.xlane.f32.xlu0 %v605
      %v607 = vpop.xlane.xlu0 %606
      %vm608 = vcmask 7168
      %609 = vst.msk [vmem:[%s385] sm:$0xff] %vm608, %v598
      %610 = vst.msk [vmem:[%s385 + $0x8] sm:$0xff] %vm608, %v601
      %611 = vst.msk [vmem:[%s385 + $0x10] sm:$0xff] %vm608, %v604
      %612 = vst.msk [vmem:[%s385 + $0x18] sm:$0xff] %vm608, %v607
      %s613 = smul.u32 2, %s22
      %p614 = scmp.lt.s32.totalorder %s23, 1
      %s615 = scalar_select %p614, %s23, 1
      %p616 = scmp.lt.s32.totalorder %s613, 1
      %s617 = scalar_select %p616, %s613, 1
      %s618 = smul.addr %s615, 8
      %s619 = sadd.s32 %s617, %s618
      %s620 = smul.addr %s619, 8
      %s621 = scalar_lea.vmem %s5, %s620
      %p622 = scmp.lt.s32.totalorder %s23, 1
      %s623 = scalar_select %p622, %s23, 1
      %p624 = scmp.lt.s32.totalorder %s22, 0
      %s625 = scalar_select %p624, %s22, 0
      %s626 = smul.addr %s625, 4
      %s627 = smul.addr %s623, 4
      %s628 = sadd.s32 %s626, %s627
      %s629 = smul.addr %s628, 8
      %s630 = scalar_lea.vmem %s6, %s629
      // Predicated region
      $region41: #{_lambda_.1} parent=39 // pred_check
        %p631 = pneg %p176
      $region42: #{_lambda_.1} parent=39 // pred_check_branch
        %633 = sbr.rel (%p631) target = $region44
      $region43: #{_lambda_.1} parent=39 // pred_region
        %s634 = smul.u32 2, %s22
      $region44: #{_lambda_.1} parent=39 // pred_fallthru
        _
      // Predicated region
      $region45: #{_lambda_.1} parent=39 // pred_check
        %p635 = pneg %p204
      $region46: #{_lambda_.1} parent=39 // pred_check_branch
        %637 = sbr.rel (%p635) target = $region48
      $region47: #{_lambda_.1} parent=39 // pred_region
        _
      $region48: #{_lambda_.1} parent=39 // pred_fallthru
        _
    $region40: #{_lambda_.1} parent=5 // pred_fallthru
      _
    %p638 = scmp.le.s32.totalorder 2, %s13
    // Predicated region
    $region49: #{_lambda_.1} parent=5 // pred_check
      %p639 = pneg %p638
    $region50: #{_lambda_.1} parent=5 // pred_check_branch
      %641 = sbr.rel (%p639) target = $region52
    $region51: #{_lambda_.1} parent=5 // pred_region
      %s642 = ssub.s32 %s13, 2
      // Predicated region
      $region53: #{_lambda_.1} parent=51 // pred_check
        %p643 = pneg %p182
      $region54: #{_lambda_.1} parent=51 // pred_check_branch
        %645 = sbr.rel (%p643) target = $region56
      $region55: #{_lambda_.1} parent=51 // pred_region
        %s646 = smul.u32 2, %s24
        %p647 = scmp.lt.s32.totalorder %s25, 1
        %s648 = scalar_select %p647, %s25, 1
        %p649 = scmp.lt.s32.totalorder %s646, 1
        %s650 = scalar_select %p649, %s646, 1
        %s651 = smul.addr %s648, 8
        %s652 = sadd.s32 %s650, %s651
        %s653 = smul.addr %s652, 8
        %s654 = scalar_lea.vmem %s5, %s653
      $region56: #{_lambda_.1} parent=51 // pred_fallthru
        _
      // Predicated region
      $region57: #{_lambda_.1} parent=51 // pred_check
        %p655 = pneg %p210
      $region58: #{_lambda_.1} parent=51 // pred_check_branch
        %657 = sbr.rel (%p655) target = $region60
      $region59: #{_lambda_.1} parent=51 // pred_region
        %p658 = scmp.lt.s32.totalorder %s25, 1
        %s659 = scalar_select %p658, %s25, 1
        %p660 = scmp.lt.s32.totalorder %s24, 0
        %s661 = scalar_select %p660, %s24, 0
        %s662 = smul.addr %s661, 4
        %s663 = smul.addr %s659, 4
        %s664 = sadd.s32 %s662, %s663
        %s665 = smul.addr %s664, 8
        %s666 = scalar_lea.vmem %s6, %s665
      $region60: #{_lambda_.1} parent=51 // pred_fallthru
        _
    $region52: #{_lambda_.1} parent=5 // pred_fallthru
      _
  $region6: #{_lambda_.1} parent=0 // loop_footer
    %s17 = sadd.s32 1, %s13
  $region7: #{_lambda_.1} parent=0 // loop_footer_branch
    %12 = sbr.rel target = $region3
  $region8: #{_lambda_.1} parent=0 // loop_exit
    _

</llo_original>
